<compile_context>
chip_gen: v7x
topology: tpu7x:2x2x1
jax: 0.10.0
libtpu: 0.0.40
codegen_flags: <defaults>
</compile_context>

<pallas_src>
import jax
import jax.numpy as jnp
from jax.experimental import pallas as pl
from jax.experimental.pallas import tpu as pltpu


def _round_up(x, m):
    return ((x + m - 1) // m) * m


def _gnn_fullk_kernel(x_ref, w_ref, o_ref):
    # Full-K reduction in one MXU call.  X is cast to bf16 on-chip (fused
    # cast: no extra HBM pass in the wrapper); accumulation is f32 on the MXU.
    x = x_ref[...]
    if x.dtype != jnp.bfloat16:
        x = x.astype(jnp.bfloat16)
    o_ref[...] = jnp.dot(
        x, w_ref[...], preferred_element_type=jnp.float32
    ).astype(o_ref.dtype)


def _gnn_ksplit_kernel(x_ref, w_ref, o_ref, acc_ref):
    # Large-F_in fallback: accumulate partial products over the K grid axis
    # in an f32 VMEM scratch; flush on the last K step (pattern P3).
    @pl.when(pl.program_id(2) == 0)
    def _():
        acc_ref[...] = jnp.zeros_like(acc_ref)

    x = x_ref[...]
    if x.dtype != jnp.bfloat16:
        x = x.astype(jnp.bfloat16)
    acc_ref[...] += jnp.dot(x, w_ref[...], preferred_element_type=jnp.float32)

    @pl.when(pl.program_id(2) == pl.num_programs(2) - 1)
    def _():
        o_ref[...] = acc_ref[...].astype(o_ref.dtype)


def _vmem_budget_and_limit():
    """Generation-aware working-set budget + scoped-VMEM limit (bytes)."""
    cap = None
    try:
        cap = getattr(pltpu.get_tpu_info(), "vmem_capacity_bytes", None)
    except Exception:
        cap = None
    if not cap:
        cap = 64 * 1024 * 1024  # conservative: v7x per-TensorCore VMEM
    # Double-buffered tile working set: ~44 MiB fits v7x's 64 MiB/TC with
    # headroom and is already past the ~85% HBM-roofline tile regime on
    # v5e/v6e (128 MiB physical VMEM).
    budget = min((cap * 11) // 16, 44 * 1024 * 1024)
    limit = max(budget + 12 * 1024 * 1024, 32 * 1024 * 1024)
    return budget, limit


def _plan_tiles(M, K, N, xbytes, obytes, budget):
    """Pick (mode, tm, tn, tk) under the VMEM budget.

    mode == "fullk": single MXU reduction over all of K (no K grid axis).
    mode == "ksplit": K grid axis with an f32 accumulator (huge F_in only).
    """
    # tn == N exactly when F_out <= 512: W stays fully resident in VMEM and
    # there are no partial N blocks; otherwise lane-dense 512-wide tiles.
    tn0 = N if N <= 512 else 512

    def fullk_bytes(tm_, tn_):
        # double-buffered X tile (caller dtype) + bf16 W tile + output tile
        return 2 * tm_ * K * xbytes + 2 * K * tn_ * 2 + 2 * tm_ * tn_ * obytes

    # Shrink tm first (MXU-friendly floor 256), only then shrink tn (>= 128).
    tn_opts = [t for t in (tn0, 256, 128) if t <= tn0]
    for tn_ in tn_opts:
        for tm_ in (2048, 1024, 512, 256):
            tm_eff = M if M < tm_ else tm_
            if fullk_bytes(tm_eff, tn_) <= budget:
                # Give the v7x megacore >= 2 parallel grid steps along M
                # (neutral on single-TensorCore v5e/v6e).
                if M >= 512 and pl.cdiv(M, tm_eff) == 1:
                    tm_eff = _round_up(pl.cdiv(M, 2), 256)
                return "fullk", tm_eff, tn_, None

    # K-split fallback: keep tiles MXU-sized instead of collapsing tm.
    tn_ = min(256, tn0)
    for tk_ in (2048, 1024, 512, 256, 128):
        for tm_ in (512, 256):
            tm_eff = M if M < tm_ else tm_
            b = (2 * tm_eff * tk_ * xbytes + 2 * tk_ * tn_ * 2
                 + 2 * tm_eff * tn_ * obytes + tm_eff * tn_ * 4)
            if b <= budget:
                return "ksplit", tm_eff, tn_, tk_
    return "ksplit", min(M, 256), min(128, tn0), 128


def prepare_weight(w):
    """One-time parameter prep (done once at init): bf16-resident W."""
    return w if w.dtype == jnp.bfloat16 else w.astype(jnp.bfloat16)


def gnn_forward(x, w, *, vmem_budget_bytes=None):
    """Computes X @ W (the GNN.forward dense projection) with a Pallas kernel."""
    M, K = x.shape
    K2, N = w.shape
    assert K == K2, "inner dims must match"

    # bf16 activations -> bf16 output (half the output HBM writes);
    # f32 activations -> f32 output (matching the f32 PyTorch module).
    out_dtype = jnp.bfloat16 if x.dtype == jnp.bfloat16 else jnp.float32
    xbytes = 2 if x.dtype == jnp.bfloat16 else 4
    obytes = 2 if out_dtype == jnp.bfloat16 else 4

    # W is tiny next to X; this is a no-op when prepare_weight() was used.
    wb = prepare_weight(w)

    budget, vmem_limit = _vmem_budget_and_limit()
    if vmem_budget_bytes is not None:
        budget = vmem_budget_bytes
    mode, tm, tn, tk = _plan_tiles(M, K, N, xbytes, obytes, budget)

    cost = pl.CostEstimate(
        flops=2 * M * N * K,
        transcendentals=0,
        bytes_accessed=M * K * xbytes + K * N * 2 + M * N * obytes,
    )
    compiler_params = pltpu.CompilerParams(
        dimension_semantics=(("parallel", "parallel") if mode == "fullk"
                             else ("parallel", "parallel", "arbitrary")),
        vmem_limit_bytes=vmem_limit,
    )

    if mode == "fullk":
        grid = (pl.cdiv(M, tm), pl.cdiv(N, tn))
        return pl.pallas_call(
            _gnn_fullk_kernel,
            out_shape=jax.ShapeDtypeStruct((M, N), out_dtype),
            grid_spec=pltpu.PrefetchScalarGridSpec(
                num_scalar_prefetch=0,
                grid=grid,
                in_specs=[
                    # X row tile: depends only on i (streams through VMEM).
                    pl.BlockSpec((tm, K), lambda i, j: (i, 0)),
                    # W column tile: depends only on j -> resident across all
                    # M tiles (fully resident when F_out <= 512).
                    pl.BlockSpec((K, tn), lambda i, j: (0, j)),
                ],
                out_specs=pl.BlockSpec((tm, tn), lambda i, j: (i, j)),
            ),
            compiler_params=compiler_params,
            cost_estimate=cost,
        )(x, wb)

    # ---- K-split path (very large F_in) ----
    # The contraction axis must tile exactly (OOB garbage there would corrupt
    # the sum), so pad K to a multiple of 128 with zeros and pick a K tile
    # that divides it.  This is the only case that copies X in the wrapper.
    Kp = _round_up(K, 128)
    tk_eff = 128
    for cand in range(tk, 127, -128):
        if Kp % cand == 0:
            tk_eff = cand
            break
    xk, wk = x, wb
    if Kp != K:
        # TODO(synk): for ragged F_in, zero-pad the features to a multiple of
        # 128 once upstream (data prep) so this per-call pad of X disappears.
        xk = jnp.pad(x, ((0, 0), (0, Kp - K)))
        wk = jnp.pad(wb, ((0, Kp - K), (0, 0)))

    grid = (pl.cdiv(M, tm), pl.cdiv(N, tn), Kp // tk_eff)
    return pl.pallas_call(
        _gnn_ksplit_kernel,
        out_shape=jax.ShapeDtypeStruct((M, N), out_dtype),
        grid_spec=pltpu.PrefetchScalarGridSpec(
            num_scalar_prefetch=0,
            grid=grid,
            in_specs=[
                pl.BlockSpec((tm, tk_eff), lambda i, j, k: (i, k)),
                pl.BlockSpec((tk_eff, tn), lambda i, j, k: (k, j)),
            ],
            out_specs=pl.BlockSpec((tm, tn), lambda i, j, k: (i, j)),
            scratch_shapes=[pltpu.VMEM((tm, tn), jnp.float32)],
        ),
        compiler_params=compiler_params,
        cost_estimate=cost,
    )(xk, wk)


if __name__ == "__main__":
    key = jax.random.PRNGKey(0)
    kx, kw = jax.random.split(key)

    # GNN-like shapes: 256 nodes, 256 input features, 128 output classes.
    M, K, N = 256, 256, 128
    X = jax.random.normal(kx, (M, K), dtype=jnp.float32)
    W = jax.random.normal(kw, (K, N), dtype=jnp.float32) * 0.02
    Wb = prepare_weight(W)            # one-time bf16 parameter cast

    fwd = jax.jit(gnn_forward)
    out = jax.block_until_ready(fwd(X, Wb))
    assert out.shape == (M, N) and out.dtype == jnp.float32

    # Tight check vs the same bf16-input / f32-accumulate reference.
    ref_bf16 = jnp.dot(X.astype(jnp.bfloat16), W.astype(jnp.bfloat16),
                       preferred_element_type=jnp.float32)
    assert jnp.allclose(out, ref_bf16, atol=1e-3, rtol=1e-3)
    # Loose check vs the full-f32 reference (bf16 input rounding only).
    ref_f32 = X @ W
    assert jnp.allclose(out, ref_f32, atol=2e-2, rtol=5e-2)

    # bf16 activations -> bf16 output path (halved output HBM traffic).
    out_b = jax.block_until_ready(fwd(X.astype(jnp.bfloat16), Wb))
    assert out_b.dtype == jnp.bfloat16
    assert jnp.allclose(out_b.astype(jnp.float32), ref_bf16, atol=3e-2, rtol=3e-2)

    # Ragged shapes (200 nodes, 100 feats, 40 classes): exact full-dim blocks,
    # no wrapper-side padding of X and no output slicing.
    M2, K2, N2 = 200, 100, 40
    X2 = jax.random.normal(kx, (M2, K2), dtype=jnp.float32)
    W2 = jax.random.normal(kw, (K2, N2), dtype=jnp.float32) * 0.02
    out2 = jax.block_until_ready(fwd(X2, prepare_weight(W2)))
    ref2 = jnp.dot(X2.astype(jnp.bfloat16), W2.astype(jnp.bfloat16),
                   preferred_element_type=jnp.float32)
    assert out2.shape == (M2, N2)
    assert jnp.allclose(out2, ref2, atol=1e-3, rtol=1e-3)

    # Exercise the large-F_in K-split path by forcing a tiny planning budget.
    M3, K3, N3 = 256, 512, 128
    X3 = jax.random.normal(kx, (M3, K3), dtype=jnp.float32)
    W3 = jax.random.normal(kw, (K3, N3), dtype=jnp.float32) * 0.02
    out3 = jax.block_until_ready(
        gnn_forward(X3, prepare_weight(W3), vmem_budget_bytes=1 << 20))
    ref3 = jnp.dot(X3.astype(jnp.bfloat16), W3.astype(jnp.bfloat16),
                   preferred_element_type=jnp.float32)
    assert out3.shape == (M3, N3)
    assert jnp.allclose(out3, ref3, atol=1e-3, rtol=1e-3)

    # TODO(synk): ovr_lr_loss (training-only helper) not implemented; only the
    # forward projection X @ W is a kernel.
    print("KERNEL_OK")
</pallas_src>

<mosaic_0001>
module attributes {stable_mosaic.version = 11 : i64} {
  func.func @_gnn_fullk_kernel(%arg0: i32, %arg1: i32, %arg2: memref<256x256xf32, #tpu.memory_space<vmem>>, %arg3: memref<256x128xbf16, #tpu.memory_space<vmem>>, %arg4: memref<256x128xf32, #tpu.memory_space<vmem>>) attributes {dimension_semantics = [#tpu.dimension_semantics<parallel>, #tpu.dimension_semantics<parallel>], iteration_bounds = array<i64: 1, 1>, scalar_prefetch = 0 : i64, scratch_operands = 0 : i64, tpu.core_type = #tpu.core_type<tc>, window_params = [{transform_indices = @transform_0, window_bounds = array<i64: 256, 256>}, {transform_indices = @transform_1, window_bounds = array<i64: 256, 128>}, {transform_indices = @transform_2, window_bounds = array<i64: 256, 128>}]} {
    %c0 = arith.constant 0 : index
    %c0_0 = arith.constant 0 : index
    %0 = vector.load %arg2[%c0, %c0_0] : memref<256x256xf32, #tpu.memory_space<vmem>>, vector<256x256xf32>
    %1 = arith.truncf %0 : vector<256x256xf32> to vector<256x256xbf16>
    %c0_1 = arith.constant 0 : index
    %c0_2 = arith.constant 0 : index
    %2 = vector.load %arg3[%c0_1, %c0_2] : memref<256x128xbf16, #tpu.memory_space<vmem>>, vector<256x128xbf16>
    %cst = arith.constant dense<0.000000e+00> : vector<256x128xf32>
    %3 = tpu.matmul %1, %2, %cst {dimension_numbers = #tpu.dot_dimension_numbers<[1], [0], [0], [1], [0, 0, 1, 1], [], []>} : vector<256x256xbf16>, vector<256x128xbf16>, vector<256x128xf32> -> vector<256x128xf32>
    %c0_3 = arith.constant 0 : index
    %c0_4 = arith.constant 0 : index
    %4 = vector.load %arg4[%c0_3, %c0_4] : memref<256x128xf32, #tpu.memory_space<vmem>>, vector<256x128xf32>
    tpu.vector_store %arg4[%c0_3, %c0_4], %3 {strides = array<i32>} : memref<256x128xf32, #tpu.memory_space<vmem>>, vector<256x128xf32>,
    return
  }
  func.func @transform_0(%arg0: i32, %arg1: i32) -> (i32, i32) {
    %c0_i32 = arith.constant 0 : i32
    %c0_i32_0 = arith.constant 0 : i32
    return %arg0, %c0_i32 : i32, i32
  }
  func.func @transform_1(%arg0: i32, %arg1: i32) -> (i32, i32) {
    %c0_i32 = arith.constant 0 : i32
    %c0_i32_0 = arith.constant 0 : i32
    return %c0_i32, %arg1 : i32, i32
  }
  func.func @transform_2(%arg0: i32, %arg1: i32) -> (i32, i32) {
    %c0_i32 = arith.constant 0 : i32
    return %arg0, %arg1 : i32, i32
  }
}

</mosaic_0001>

<llo_original>
// kernel: gnn_forward.1
$region0: #{gnn_forward.1}
  #allocation0 [shape = 'u32[]', space=smem, size = 0x4, offset = 0x4, fixed_abs, tag = 'smem constant byte address 0x4 - core index']
  #allocation1 [shape = 'u32[144,128]{1,0:T(1,128)}', space=vmem, size = 0x12000, scoped, tag = 'internal scratch']
  %s0 = inlined_call_operand.hbm [shape: f32[256,256], index: 0, kind: input, shape index: {}]
  %s1 = inlined_call_operand.hbm [shape: bf16[256,128], index: 1, kind: input, shape index: {}]
  %s2 = inlined_call_operand.hbm [shape: f32[256,128], index: 2, kind: output, shape index: {}]
  %s3 = sld [smem:[#allocation0]]
  $region26: #{gnn_forward.1} parent=0
    _
  %s5 = ssub.s32 1, %s3
  %s6 = scalar_select 0, %s5, %s3
  $region1: #{gnn_forward.1} parent=0
    #allocation2 [shape = 'u8[262144]{0}', space=vmem, size = 0x40000, scoped, tag = 'input window, operand 0, single buffered']
    #allocation3 [shape = 's32[1]{0}', space=sflag, size = 0x4, scoped, tag = 'scoped memory for gnn_forward.1']
    #allocation4 [shape = 's32[1]{0}', space=sflag, size = 0x4, scoped, tag = 'scoped memory for gnn_forward.1']
    #allocation5 [shape = 'u8[65536]{0}', space=vmem, size = 0x10000, scoped, tag = 'input window, operand 1, single buffered']
    #allocation6 [shape = 's32[1]{0}', space=sflag, size = 0x4, scoped, tag = 'scoped memory for gnn_forward.1']
    #allocation7 [shape = 'u8[131072]{0}', space=vmem, size = 0x20000, scoped, tag = 'output window, operand 0, single buffered']
    %7 = vsyncpa [#allocation3], 0
    %8 = vsyncpa [#allocation6], 0
    %9 = vsyncpa [#allocation4], 0
    // Predicated region
    $region2: #{gnn_forward.1} parent=1 // pred_check
      _
    $region3: #{gnn_forward.1} parent=1 // pred_check_branch
      %11 = sbr.rel (0) target = $region5
    $region4: #{gnn_forward.1} parent=1 // pred_region
      %s13 = ssub.s32 8192, 8192
      %14 = vsyncadd [#allocation3], %s13
      %s15 = sshll.u32 [#allocation2], 4
      %s16 = int_to_ptr.vmem [resolvable:$true] %s15
      %21 = dma.hbm_to_vmem [thread:$0]  %s0, 8192, %s16, [#allocation3], 256, 256, 16
    $region5: #{gnn_forward.1} parent=1 // pred_fallthru
      _
    // Predicated region
    $region6: #{gnn_forward.1} parent=1 // pred_check
      _
    $region7: #{gnn_forward.1} parent=1 // pred_check_branch
      %23 = sbr.rel (0) target = $region9
    $region8: #{gnn_forward.1} parent=1 // pred_region
      %s25 = ssub.s32 2048, 2048
      %26 = vsyncadd [#allocation6], %s25
      %s27 = sshll.u32 [#allocation5], 4
      %s28 = int_to_ptr.vmem [resolvable:$true] %s27
      %33 = dma.hbm_to_vmem [thread:$0]  %s1, 2048, %s28, [#allocation6], 64, 64, 4
    $region9: #{gnn_forward.1} parent=1 // pred_fallthru
      _
    // Predicated region
    $region10: #{gnn_forward.1} parent=1 // pred_check
      _
    $region11: #{gnn_forward.1} parent=1 // pred_check_branch
      %35 = sbr.rel (0) target = $region13
    $region12: #{gnn_forward.1} parent=1 // pred_region
      %36 = dma.done [#allocation3], 8192
    $region13: #{gnn_forward.1} parent=1 // pred_fallthru
      _
    // Predicated region
    $region14: #{gnn_forward.1} parent=1 // pred_check
      _
    $region15: #{gnn_forward.1} parent=1 // pred_check_branch
      %38 = sbr.rel (0) target = $region17
    $region16: #{gnn_forward.1} parent=1 // pred_region
      %39 = dma.done [#allocation6], 2048
    $region17: #{gnn_forward.1} parent=1 // pred_fallthru
      _
    %v41 = vld [vmem:[#allocation2] sm:$0xff]
    %v42 = vld [vmem:[#allocation2 + $0x8] sm:$0xff]
    %v43 = vld [vmem:[#allocation2 + $0x10] sm:$0xff]
    %v44 = vld [vmem:[#allocation2 + $0x18] sm:$0xff]
    %v45 = vld [vmem:[#allocation2 + $0x20] sm:$0xff]
    %v46 = vld [vmem:[#allocation2 + $0x28] sm:$0xff]
    %v47 = vld [vmem:[#allocation2 + $0x30] sm:$0xff]
    %v48 = vld [vmem:[#allocation2 + $0x38] sm:$0xff]
    %v49 = vld [vmem:[#allocation2 + $0x40] sm:$0xff]
    %v50 = vld [vmem:[#allocation2 + $0x48] sm:$0xff]
    %v51 = vld [vmem:[#allocation2 + $0x50] sm:$0xff]
    %v52 = vld [vmem:[#allocation2 + $0x58] sm:$0xff]
    %v53 = vld [vmem:[#allocation2 + $0x60] sm:$0xff]
    %v54 = vld [vmem:[#allocation2 + $0x68] sm:$0xff]
    %v55 = vld [vmem:[#allocation2 + $0x70] sm:$0xff]
    %v56 = vld [vmem:[#allocation2 + $0x78] sm:$0xff]
    %v57 = vld [vmem:[#allocation2 + $0x80] sm:$0xff]
    %v58 = vld [vmem:[#allocation2 + $0x88] sm:$0xff]
    %v59 = vld [vmem:[#allocation2 + $0x90] sm:$0xff]
    %v60 = vld [vmem:[#allocation2 + $0x98] sm:$0xff]
    %v61 = vld [vmem:[#allocation2 + $0xa0] sm:$0xff]
    %v62 = vld [vmem:[#allocation2 + $0xa8] sm:$0xff]
    %v63 = vld [vmem:[#allocation2 + $0xb0] sm:$0xff]
    %v64 = vld [vmem:[#allocation2 + $0xb8] sm:$0xff]
    %v65 = vld [vmem:[#allocation2 + $0xc0] sm:$0xff]
    %v66 = vld [vmem:[#allocation2 + $0xc8] sm:$0xff]
    %v67 = vld [vmem:[#allocation2 + $0xd0] sm:$0xff]
    %v68 = vld [vmem:[#allocation2 + $0xd8] sm:$0xff]
    %v69 = vld [vmem:[#allocation2 + $0xe0] sm:$0xff]
    %v70 = vld [vmem:[#allocation2 + $0xe8] sm:$0xff]
    %v71 = vld [vmem:[#allocation2 + $0xf0] sm:$0xff]
    %v72 = vld [vmem:[#allocation2 + $0xf8] sm:$0xff]
    %v73 = vld [vmem:[#allocation2 + $0x100] sm:$0xff]
    %v74 = vld [vmem:[#allocation2 + $0x108] sm:$0xff]
    %v75 = vld [vmem:[#allocation2 + $0x110] sm:$0xff]
    %v76 = vld [vmem:[#allocation2 + $0x118] sm:$0xff]
    %v77 = vld [vmem:[#allocation2 + $0x120] sm:$0xff]
    %v78 = vld [vmem:[#allocation2 + $0x128] sm:$0xff]
    %v79 = vld [vmem:[#allocation2 + $0x130] sm:$0xff]
    %v80 = vld [vmem:[#allocation2 + $0x138] sm:$0xff]
    %v81 = vld [vmem:[#allocation2 + $0x140] sm:$0xff]
    %v82 = vld [vmem:[#allocation2 + $0x148] sm:$0xff]
    %v83 = vld [vmem:[#allocation2 + $0x150] sm:$0xff]
    %v84 = vld [vmem:[#allocation2 + $0x158] sm:$0xff]
    %v85 = vld [vmem:[#allocation2 + $0x160] sm:$0xff]
    %v86 = vld [vmem:[#allocation2 + $0x168] sm:$0xff]
    %v87 = vld [vmem:[#allocation2 + $0x170] sm:$0xff]
    %v88 = vld [vmem:[#allocation2 + $0x178] sm:$0xff]
    %v89 = vld [vmem:[#allocation2 + $0x180] sm:$0xff]
    %v90 = vld [vmem:[#allocation2 + $0x188] sm:$0xff]
    %v91 = vld [vmem:[#allocation2 + $0x190] sm:$0xff]
    %v92 = vld [vmem:[#allocation2 + $0x198] sm:$0xff]
    %v93 = vld [vmem:[#allocation2 + $0x1a0] sm:$0xff]
    %v94 = vld [vmem:[#allocation2 + $0x1a8] sm:$0xff]
    %v95 = vld [vmem:[#allocation2 + $0x1b0] sm:$0xff]
    %v96 = vld [vmem:[#allocation2 + $0x1b8] sm:$0xff]
    %v97 = vld [vmem:[#allocation2 + $0x1c0] sm:$0xff]
    %v98 = vld [vmem:[#allocation2 + $0x1c8] sm:$0xff]
    %v99 = vld [vmem:[#allocation2 + $0x1d0] sm:$0xff]
    %v100 = vld [vmem:[#allocation2 + $0x1d8] sm:$0xff]
    %v101 = vld [vmem:[#allocation2 + $0x1e0] sm:$0xff]
    %v102 = vld [vmem:[#allocation2 + $0x1e8] sm:$0xff]
    %v103 = vld [vmem:[#allocation2 + $0x1f0] sm:$0xff]
    %v104 = vld [vmem:[#allocation2 + $0x1f8] sm:$0xff]
    %v105 = vpack.c.bf16 %v43, %v41
    %v106 = vpack.c.bf16 %v44, %v42
    %v107 = vpack.c.bf16 %v47, %v45
    %v108 = vpack.c.bf16 %v48, %v46
    %v109 = vpack.c.bf16 %v51, %v49
    %v110 = vpack.c.bf16 %v52, %v50
    %v111 = vpack.c.bf16 %v55, %v53
    %v112 = vpack.c.bf16 %v56, %v54
    %v113 = vpack.c.bf16 %v59, %v57
    %v114 = vpack.c.bf16 %v60, %v58
    %v115 = vpack.c.bf16 %v63, %v61
    %v116 = vpack.c.bf16 %v64, %v62
    %v117 = vpack.c.bf16 %v67, %v65
    %v118 = vpack.c.bf16 %v68, %v66
    %v119 = vpack.c.bf16 %v71, %v69
    %v120 = vpack.c.bf16 %v72, %v70
    %v121 = vpack.c.bf16 %v75, %v73
    %v122 = vpack.c.bf16 %v76, %v74
    %v123 = vpack.c.bf16 %v79, %v77
    %v124 = vpack.c.bf16 %v80, %v78
    %v125 = vpack.c.bf16 %v83, %v81
    %v126 = vpack.c.bf16 %v84, %v82
    %v127 = vpack.c.bf16 %v87, %v85
    %v128 = vpack.c.bf16 %v88, %v86
    %v129 = vpack.c.bf16 %v91, %v89
    %v130 = vpack.c.bf16 %v92, %v90
    %v131 = vpack.c.bf16 %v95, %v93
    %v132 = vpack.c.bf16 %v96, %v94
    %v133 = vpack.c.bf16 %v99, %v97
    %v134 = vpack.c.bf16 %v100, %v98
    %v135 = vpack.c.bf16 %v103, %v101
    %v136 = vpack.c.bf16 %v104, %v102
    %v137 = vld [vmem:[#allocation5] sm:$0xf]
    %v138 = vld [vmem:[#allocation5 + $0x4] sm:$0xf]
    %v139 = vld [vmem:[#allocation5 + $0x8] sm:$0xf]
    %v140 = vld [vmem:[#allocation5 + $0xc] sm:$0xf]
    %v141 = vld [vmem:[#allocation5 + $0x10] sm:$0xf]
    %v142 = vld [vmem:[#allocation5 + $0x14] sm:$0xf]
    %v143 = vld [vmem:[#allocation5 + $0x18] sm:$0xf]
    %v144 = vld [vmem:[#allocation5 + $0x1c] sm:$0xf]
    %v145 = vld [vmem:[#allocation5 + $0x20] sm:$0xf]
    %v146 = vld [vmem:[#allocation5 + $0x24] sm:$0xf]
    %v147 = vld [vmem:[#allocation5 + $0x28] sm:$0xf]
    %v148 = vld [vmem:[#allocation5 + $0x2c] sm:$0xf]
    %v149 = vld [vmem:[#allocation5 + $0x30] sm:$0xf]
    %v150 = vld [vmem:[#allocation5 + $0x34] sm:$0xf]
    %v151 = vld [vmem:[#allocation5 + $0x38] sm:$0xf]
    %v152 = vld [vmem:[#allocation5 + $0x3c] sm:$0xf]
    %v153 = vld [vmem:[#allocation5 + $0x40] sm:$0xf]
    %v154 = vld [vmem:[#allocation5 + $0x44] sm:$0xf]
    %v155 = vld [vmem:[#allocation5 + $0x48] sm:$0xf]
    %v156 = vld [vmem:[#allocation5 + $0x4c] sm:$0xf]
    %v157 = vld [vmem:[#allocation5 + $0x50] sm:$0xf]
    %v158 = vld [vmem:[#allocation5 + $0x54] sm:$0xf]
    %v159 = vld [vmem:[#allocation5 + $0x58] sm:$0xf]
    %v160 = vld [vmem:[#allocation5 + $0x5c] sm:$0xf]
    %v161 = vld [vmem:[#allocation5 + $0x60] sm:$0xf]
    %v162 = vld [vmem:[#allocation5 + $0x64] sm:$0xf]
    %v163 = vld [vmem:[#allocation5 + $0x68] sm:$0xf]
    %v164 = vld [vmem:[#allocation5 + $0x6c] sm:$0xf]
    %v165 = vld [vmem:[#allocation5 + $0x70] sm:$0xf]
    %v166 = vld [vmem:[#allocation5 + $0x74] sm:$0xf]
    %v167 = vld [vmem:[#allocation5 + $0x78] sm:$0xf]
    %v168 = vld [vmem:[#allocation5 + $0x7c] sm:$0xf]
    %v201 = vunpack.c.l.b16 %v137
    %v202 = vunpack.c.l.b16 %v138
    %v203 = vunpack.c.l.b16 %v139
    %v204 = vunpack.c.l.b16 %v140
    %v205 = vunpack.c.l.b16 %v141
    %v206 = vunpack.c.l.b16 %v142
    %v207 = vunpack.c.l.b16 %v143
    %v208 = vunpack.c.l.b16 %v144
    %v209 = vunpack.c.l.b16 %v145
    %v210 = vunpack.c.l.b16 %v146
    %v211 = vunpack.c.l.b16 %v147
    %v212 = vunpack.c.l.b16 %v148
    %v213 = vunpack.c.l.b16 %v149
    %v214 = vunpack.c.l.b16 %v150
    %v215 = vunpack.c.l.b16 %v151
    %v216 = vunpack.c.l.b16 %v152
    %v217 = vunpack.c.l.b16 %v153
    %v218 = vunpack.c.l.b16 %v154
    %v219 = vunpack.c.l.b16 %v155
    %v220 = vunpack.c.l.b16 %v156
    %v221 = vunpack.c.l.b16 %v157
    %v222 = vunpack.c.l.b16 %v158
    %v223 = vunpack.c.l.b16 %v159
    %v224 = vunpack.c.l.b16 %v160
    %v225 = vunpack.c.l.b16 %v161
    %v226 = vunpack.c.l.b16 %v162
    %v227 = vunpack.c.l.b16 %v163
    %v228 = vunpack.c.l.b16 %v164
    %v229 = vunpack.c.l.b16 %v165
    %v230 = vunpack.c.l.b16 %v166
    %v231 = vunpack.c.l.b16 %v167
    %v232 = vunpack.c.l.b16 %v168
    %v233 = vpack.c.b16 %v202, %v201
    %v234 = vpack.c.b16 %v204, %v203
    %v235 = vpack.c.b16 %v206, %v205
    %v236 = vpack.c.b16 %v208, %v207
    %v237 = vpack.c.b16 %v210, %v209
    %v238 = vpack.c.b16 %v212, %v211
    %v239 = vpack.c.b16 %v214, %v213
    %v240 = vpack.c.b16 %v216, %v215
    %v241 = vpack.c.b16 %v218, %v217
    %v242 = vpack.c.b16 %v220, %v219
    %v243 = vpack.c.b16 %v222, %v221
    %v244 = vpack.c.b16 %v224, %v223
    %v245 = vpack.c.b16 %v226, %v225
    %v246 = vpack.c.b16 %v228, %v227
    %v247 = vpack.c.b16 %v230, %v229
    %v248 = vpack.c.b16 %v232, %v231
    %265 = vmatprep.subr.bf16.mxu0 0
    %266 = vmatpush1.bf16.msra.mxu0 %v233
    %267 = vmatprep.subr.bf16.mxu0 0
    %268 = vmatpush1.bf16.msra.mxu0 %v234
    %269 = vmatprep.subr.bf16.mxu0 0
    %270 = vmatpush1.bf16.msra.mxu0 %v235
    %271 = vmatprep.subr.bf16.mxu0 0
    %272 = vmatpush1.bf16.msra.mxu0 %v236
    %273 = vmatprep.subr.bf16.mxu0 0
    %274 = vmatpush1.bf16.msra.mxu0 %v237
    %275 = vmatprep.subr.bf16.mxu0 0
    %276 = vmatpush1.bf16.msra.mxu0 %v238
    %277 = vmatprep.subr.bf16.mxu0 0
    %278 = vmatpush1.bf16.msra.mxu0 %v239
    %279 = vmatprep.subr.bf16.mxu0 0
    %280 = vmatpush1.bf16.msra.mxu0 %v240
    %281 = vmatprep.subr.bf16.mxu0 0
    %282 = vmatpush1.bf16.msra.mxu0 %v241
    %283 = vmatprep.subr.bf16.mxu0 0
    %284 = vmatpush1.bf16.msra.mxu0 %v242
    %285 = vmatprep.subr.bf16.mxu0 0
    %286 = vmatpush1.bf16.msra.mxu0 %v243
    %287 = vmatprep.subr.bf16.mxu0 0
    %288 = vmatpush1.bf16.msra.mxu0 %v244
    %289 = vmatprep.subr.bf16.mxu0 0
    %290 = vmatpush1.bf16.msra.mxu0 %v245
    %291 = vmatprep.subr.bf16.mxu0 0
    %292 = vmatpush1.bf16.msra.mxu0 %v246
    %293 = vmatprep.subr.bf16.mxu0 0
    %294 = vmatpush1.bf16.msra.mxu0 %v247
    %295 = vmatprep.subr.bf16.mxu0 0
    %296 = vmatpush1.bf16.msra.mxu0 %v248
    %297 = vmatprep.mubr.bf16.mxu0 %v106
    %298 = vmatmul.mubr.bf16.gmra.mrb[0].mxu0 %v105
    %v299 = vpop.f32.mrb[0].mxu0
    %v300 = vadd.f32 0.0, %v299
    %v301 = vpop.f32.mrb[0].mxu0
    %v302 = vpop.f32.mrb[0].mxu0
    %v303 = vadd.f32 0.0, %v302
    %v304 = vpop.f32.mrb[0].mxu0
    %305 = vmatprep.mubr.bf16.mxu0 %v108
    %306 = vmatmul.mubr.bf16.gmra.mrb[0].mxu0 %v107
    %v307 = vpop.f32.mrb[0].mxu0
    %v308 = vadd.f32 0.0, %v307
    %v309 = vpop.f32.mrb[0].mxu0
    %v310 = vpop.f32.mrb[0].mxu0
    %v311 = vadd.f32 0.0, %v310
    %v312 = vpop.f32.mrb[0].mxu0
    %313 = vmatprep.mubr.bf16.mxu0 %v110
    %314 = vmatmul.mubr.bf16.gmra.mrb[0].mxu0 %v109
    %v315 = vpop.f32.mrb[0].mxu0
    %v316 = vadd.f32 0.0, %v315
    %v317 = vpop.f32.mrb[0].mxu0
    %v318 = vpop.f32.mrb[0].mxu0
    %v319 = vadd.f32 0.0, %v318
    %v320 = vpop.f32.mrb[0].mxu0
    %321 = vmatprep.mubr.bf16.mxu0 %v112
    %322 = vmatmul.mubr.bf16.gmra.mrb[0].mxu0 %v111
    %v323 = vpop.f32.mrb[0].mxu0
    %v324 = vadd.f32 0.0, %v323
    %v325 = vpop.f32.mrb[0].mxu0
    %v326 = vpop.f32.mrb[0].mxu0
    %v327 = vadd.f32 0.0, %v326
    %v328 = vpop.f32.mrb[0].mxu0
    %329 = vmatprep.mubr.bf16.mxu0 %v114
    %330 = vmatmul.mubr.bf16.gmra.mrb[0].mxu0 %v113
    %v331 = vpop.f32.mrb[0].mxu0
    %v332 = vadd.f32 0.0, %v331
    %v333 = vpop.f32.mrb[0].mxu0
    %v334 = vpop.f32.mrb[0].mxu0
    %v335 = vadd.f32 0.0, %v334
    %v336 = vpop.f32.mrb[0].mxu0
    %337 = vmatprep.mubr.bf16.mxu0 %v116
    %338 = vmatmul.mubr.bf16.gmra.mrb[0].mxu0 %v115
    %v339 = vpop.f32.mrb[0].mxu0
    %v340 = vadd.f32 0.0, %v339
    %v341 = vpop.f32.mrb[0].mxu0
    %v342 = vpop.f32.mrb[0].mxu0
    %v343 = vadd.f32 0.0, %v342
    %v344 = vpop.f32.mrb[0].mxu0
    %345 = vmatprep.mubr.bf16.mxu0 %v118
    %346 = vmatmul.mubr.bf16.gmra.mrb[0].mxu0 %v117
    %v347 = vpop.f32.mrb[0].mxu0
    %v348 = vadd.f32 0.0, %v347
    %v349 = vpop.f32.mrb[0].mxu0
    %v350 = vpop.f32.mrb[0].mxu0
    %v351 = vadd.f32 0.0, %v350
    %v352 = vpop.f32.mrb[0].mxu0
    %353 = vmatprep.mubr.bf16.mxu0 %v120
    %354 = vmatmul.mubr.bf16.gmra.mrb[0].mxu0 %v119
    %v355 = vpop.f32.mrb[0].mxu0
    %v356 = vadd.f32 0.0, %v355
    %v357 = vpop.f32.mrb[0].mxu0
    %v358 = vpop.f32.mrb[0].mxu0
    %v359 = vadd.f32 0.0, %v358
    %v360 = vpop.f32.mrb[0].mxu0
    %361 = vmatprep.mubr.bf16.mxu0 %v122
    %362 = vmatmul.mubr.bf16.gmra.mrb[0].mxu0 %v121
    %v363 = vpop.f32.mrb[0].mxu0
    %v364 = vadd.f32 0.0, %v363
    %v365 = vpop.f32.mrb[0].mxu0
    %v366 = vpop.f32.mrb[0].mxu0
    %v367 = vadd.f32 0.0, %v366
    %v368 = vpop.f32.mrb[0].mxu0
    %369 = vmatprep.mubr.bf16.mxu0 %v124
    %370 = vmatmul.mubr.bf16.gmra.mrb[0].mxu0 %v123
    %v371 = vpop.f32.mrb[0].mxu0
    %v372 = vadd.f32 0.0, %v371
    %v373 = vpop.f32.mrb[0].mxu0
    %v374 = vpop.f32.mrb[0].mxu0
    %v375 = vadd.f32 0.0, %v374
    %v376 = vpop.f32.mrb[0].mxu0
    %377 = vmatprep.mubr.bf16.mxu0 %v126
    %378 = vmatmul.mubr.bf16.gmra.mrb[0].mxu0 %v125
    %v379 = vpop.f32.mrb[0].mxu0
    %v380 = vadd.f32 0.0, %v379
    %v381 = vpop.f32.mrb[0].mxu0
    %v382 = vpop.f32.mrb[0].mxu0
    %v383 = vadd.f32 0.0, %v382
    %v384 = vpop.f32.mrb[0].mxu0
    %385 = vmatprep.mubr.bf16.mxu0 %v128
    %386 = vmatmul.mubr.bf16.gmra.mrb[0].mxu0 %v127
    %v387 = vpop.f32.mrb[0].mxu0
    %v388 = vadd.f32 0.0, %v387
    %v389 = vpop.f32.mrb[0].mxu0
    %v390 = vpop.f32.mrb[0].mxu0
    %v391 = vadd.f32 0.0, %v390
    %v392 = vpop.f32.mrb[0].mxu0
    %393 = vmatprep.mubr.bf16.mxu0 %v130
    %394 = vmatmul.mubr.bf16.gmra.mrb[0].mxu0 %v129
    %v395 = vpop.f32.mrb[0].mxu0
    %v396 = vadd.f32 0.0, %v395
    %v397 = vpop.f32.mrb[0].mxu0
    %v398 = vpop.f32.mrb[0].mxu0
    %v399 = vadd.f32 0.0, %v398
    %v400 = vpop.f32.mrb[0].mxu0
    %401 = vmatprep.mubr.bf16.mxu0 %v132
    %402 = vmatmul.mubr.bf16.gmra.mrb[0].mxu0 %v131
    %v403 = vpop.f32.mrb[0].mxu0
    %v404 = vadd.f32 0.0, %v403
    %v405 = vpop.f32.mrb[0].mxu0
    %v406 = vpop.f32.mrb[0].mxu0
    %v407 = vadd.f32 0.0, %v406
    %v408 = vpop.f32.mrb[0].mxu0
    %409 = vmatprep.mubr.bf16.mxu0 %v134
    %410 = vmatmul.mubr.bf16.gmra.mrb[0].mxu0 %v133
    %v411 = vpop.f32.mrb[0].mxu0
    %v412 = vadd.f32 0.0, %v411
    %v413 = vpop.f32.mrb[0].mxu0
    %v414 = vpop.f32.mrb[0].mxu0
    %v415 = vadd.f32 0.0, %v414
    %v416 = vpop.f32.mrb[0].mxu0
    %417 = vmatprep.mubr.bf16.mxu0 %v136
    %418 = vmatmul.mubr.bf16.gmra.mrb[0].mxu0 %v135
    %v419 = vpop.f32.mrb[0].mxu0
    %v420 = vadd.f32 0.0, %v419
    %v421 = vpop.f32.mrb[0].mxu0
    %v422 = vpop.f32.mrb[0].mxu0
    %v423 = vadd.f32 0.0, %v422
    %v424 = vpop.f32.mrb[0].mxu0
    %425 = vdwg.mxu0
    %426 = vst [vmem:[#allocation7] sm:$0xff] %v300
    %427 = vst [vmem:[#allocation7 + $0x8] sm:$0xff] %v303
    %428 = vst [vmem:[#allocation7 + $0x10] sm:$0xff] %v308
    %429 = vst [vmem:[#allocation7 + $0x18] sm:$0xff] %v311
    %430 = vst [vmem:[#allocation7 + $0x20] sm:$0xff] %v316
    %431 = vst [vmem:[#allocation7 + $0x28] sm:$0xff] %v319
    %432 = vst [vmem:[#allocation7 + $0x30] sm:$0xff] %v324
    %433 = vst [vmem:[#allocation7 + $0x38] sm:$0xff] %v327
    %434 = vst [vmem:[#allocation7 + $0x40] sm:$0xff] %v332
    %435 = vst [vmem:[#allocation7 + $0x48] sm:$0xff] %v335
    %436 = vst [vmem:[#allocation7 + $0x50] sm:$0xff] %v340
    %437 = vst [vmem:[#allocation7 + $0x58] sm:$0xff] %v343
    %438 = vst [vmem:[#allocation7 + $0x60] sm:$0xff] %v348
    %439 = vst [vmem:[#allocation7 + $0x68] sm:$0xff] %v351
    %440 = vst [vmem:[#allocation7 + $0x70] sm:$0xff] %v356
    %441 = vst [vmem:[#allocation7 + $0x78] sm:$0xff] %v359
    %442 = vst [vmem:[#allocation7 + $0x80] sm:$0xff] %v364
    %443 = vst [vmem:[#allocation7 + $0x88] sm:$0xff] %v367
    %444 = vst [vmem:[#allocation7 + $0x90] sm:$0xff] %v372
    %445 = vst [vmem:[#allocation7 + $0x98] sm:$0xff] %v375
    %446 = vst [vmem:[#allocation7 + $0xa0] sm:$0xff] %v380
    %447 = vst [vmem:[#allocation7 + $0xa8] sm:$0xff] %v383
    %448 = vst [vmem:[#allocation7 + $0xb0] sm:$0xff] %v388
    %449 = vst [vmem:[#allocation7 + $0xb8] sm:$0xff] %v391
    %450 = vst [vmem:[#allocation7 + $0xc0] sm:$0xff] %v396
    %451 = vst [vmem:[#allocation7 + $0xc8] sm:$0xff] %v399
    %452 = vst [vmem:[#allocation7 + $0xd0] sm:$0xff] %v404
    %453 = vst [vmem:[#allocation7 + $0xd8] sm:$0xff] %v407
    %454 = vst [vmem:[#allocation7 + $0xe0] sm:$0xff] %v412
    %455 = vst [vmem:[#allocation7 + $0xe8] sm:$0xff] %v415
    %456 = vst [vmem:[#allocation7 + $0xf0] sm:$0xff] %v420
    %457 = vst [vmem:[#allocation7 + $0xf8] sm:$0xff] %v423
    // Predicated region
    $region18: #{gnn_forward.1} parent=1 // pred_check
      _
    $region19: #{gnn_forward.1} parent=1 // pred_check_branch
      %459 = sbr.rel (0) target = $region21
    $region20: #{gnn_forward.1} parent=1 // pred_region
      %s461 = ssub.s32 4096, 4096
      %462 = vsyncadd [#allocation4], %s461
      %s463 = sshll.u32 [#allocation7], 4
      %s464 = int_to_ptr.vmem [resolvable:$true] %s463
      %469 = dma.vmem_to_hbm [thread:$0]  %s464, 4096, %s2, [#allocation4], 128, 128, 8
    $region21: #{gnn_forward.1} parent=1 // pred_fallthru
      _
    // Predicated region
    $region22: #{gnn_forward.1} parent=1 // pred_check
      _
    $region23: #{gnn_forward.1} parent=1 // pred_check_branch
      %471 = sbr.rel (0) target = $region25
    $region24: #{gnn_forward.1} parent=1 // pred_region
      %472 = dma.done [#allocation4], 4096
    $region25: #{gnn_forward.1} parent=1 // pred_fallthru
      _
    %473 = vsyncpa [#allocation3], 1
    %474 = vsyncpa [#allocation6], 1
    %475 = vsyncpa [#allocation4], 1

</llo_original>
